<compile_context>
chip_gen: v7x
topology: tpu7x:2x2x1
jax: 0.10.0
libtpu: 0.0.40
codegen_flags: <defaults>
</compile_context>

<pallas_src>
import functools

import jax
import jax.numpy as jnp
from jax.experimental import pallas as pl
from jax.experimental.pallas import tpu as pltpu

LN_EPS = 1e-5  # torch.nn.LayerNorm default


def _round_up(x, m):
    return ((x + m - 1) // m) * m


def _device_kind():
    try:
        return jax.devices()[0].device_kind.lower()
    except Exception:
        return ""


def _pick_tm(m_rows, target, align):
    """Row tile: multiple of `align`, <= m_rows, preferring divisors of m_rows
    (so no row padding / output-slice copy is needed), but never pathologically
    smaller than the target."""
    target = max(align, _round_up(min(target, m_rows), align))
    if m_rows % target == 0:
        return target
    t = target - align
    while t >= align:
        if m_rows % t == 0 and 4 * t >= target:
            return t
        t -= align
    return target  # no good divisor; rows will be padded to a tile multiple


def _residual_layernorm(y, x_res_f32, b2, g, beta, d_in, out_dtype):
    """y (f32) + b2 + residual, then LayerNorm over the true d_in features.

    Padded lanes of y and of the residual are exactly 0 (zero-padded x, weight
    columns/rows and biases), so sum(y) and sum(y*y) over the padded width are
    already the true sums -> no lane mask needed.  Padded output lanes become
    gamma(=0)*garbage + beta(=0) = 0 and are sliced off by the wrapper.
    """
    y = y + b2 + x_res_f32
    inv_d = 1.0 / float(d_in)
    mean = jnp.sum(y, axis=-1, keepdims=True) * inv_d
    var = jnp.sum(y * y, axis=-1, keepdims=True) * inv_d - mean * mean
    var = jnp.maximum(var, 0.0)  # guard tiny negative from cancellation
    norm = (y - mean) * jax.lax.rsqrt(var + LN_EPS)
    return (norm * g + beta).astype(out_dtype)


def _ffn_kernel(x_ref, w1_ref, b1_ref, w2_ref, b2_ref, g_ref, beta_ref, o_ref,
                *, d_in, chunk_bounds, mm_dtype):
    """Resident-weights path: one row tile per grid step, weights stay in VMEM."""
    x_nat = x_ref[...]
    x_mm = x_nat if x_nat.dtype == mm_dtype else x_nat.astype(mm_dtype)

    if len(chunk_bounds) == 1:
        h = jnp.dot(x_mm, w1_ref[...], preferred_element_type=jnp.float32)
        h = jnp.maximum(h + b1_ref[...].astype(jnp.float32), 0.0)
        y = jnp.dot(h.astype(w2_ref.dtype), w2_ref[...],
                    preferred_element_type=jnp.float32)
    else:
        # Static K-split of the hidden dim: ReLU is per-hidden-unit, so the
        # second matmul accumulates chunk by chunk.  Chunks are 256-granular
        # (full v6e/v7x MXU width); the last chunk is ragged (a multiple of
        # 128) instead of padding d_hid up to the chunk size.
        y = jnp.zeros(o_ref.shape, jnp.float32)
        for lo, hi in chunk_bounds:
            hc = jnp.dot(x_mm, w1_ref[:, lo:hi],
                         preferred_element_type=jnp.float32)
            hc = jnp.maximum(hc + b1_ref[:, lo:hi].astype(jnp.float32), 0.0)
            y = y + jnp.dot(hc.astype(w2_ref.dtype), w2_ref[lo:hi, :],
                            preferred_element_type=jnp.float32)

    # TODO(synk): dropout omitted (inference / p=0 behavior).
    o_ref[...] = _residual_layernorm(
        y, x_nat.astype(jnp.float32), b2_ref[...].astype(jnp.float32),
        g_ref[...].astype(jnp.float32), beta_ref[...].astype(jnp.float32),
        d_in, o_ref.dtype)


def _ffn_stream_kernel(x_ref, w1_ref, b1_ref, w2_ref, b2_ref, g_ref, beta_ref,
                       o_ref, acc_ref, *, d_in, mm_dtype):
    """Weight-streaming path: grid axis 1 walks d_hid tiles; W1/W2 tiles are
    double-buffered through VMEM while the (tm, d_in) f32 accumulator stays
    resident.  Residual + LayerNorm run at the last hidden tile."""
    k = pl.program_id(1)

    @pl.when(k == 0)
    def _():
        acc_ref[...] = jnp.zeros_like(acc_ref)

    x_nat = x_ref[...]
    x_mm = x_nat if x_nat.dtype == mm_dtype else x_nat.astype(mm_dtype)
    h = jnp.dot(x_mm, w1_ref[...], preferred_element_type=jnp.float32)
    h = jnp.maximum(h + b1_ref[...].astype(jnp.float32), 0.0)
    acc_ref[...] += jnp.dot(h.astype(w2_ref.dtype), w2_ref[...],
                            preferred_element_type=jnp.float32)

    @pl.when(k == pl.num_programs(1) - 1)
    def _():
        # TODO(synk): dropout omitted (inference / p=0 behavior).
        o_ref[...] = _residual_layernorm(
            acc_ref[...], x_ref[...].astype(jnp.float32),
            b2_ref[...].astype(jnp.float32), g_ref[...].astype(jnp.float32),
            beta_ref[...].astype(jnp.float32), d_in, o_ref.dtype)


def positionwise_feed_forward(x, w1, b1, w2, b2, gamma, beta, *,
                              tm=None,
                              hidden_chunk=None,
                              t_hid=512,
                              matmul_dtype="auto",
                              vmem_limit_bytes=None,
                              stream_weights=None,
                              single_buffer_weights=True):
    """x: (B, L, d_in).  w1: (d_in, d_hid), w2: (d_hid, d_in).

    tm:             row tile (default: 512 on v6e, 256 elsewhere; clamped to M).
    hidden_chunk:   optional K-split of the hidden dim (rounded to 256).
    t_hid:          hidden tile for the weight-streaming path.
    matmul_dtype:   "auto" -> bf16 MXU passes (f32 accumulation) when weights
                    are f32; None -> native dtype; or an explicit dtype.
    stream_weights: None -> auto (stream if resident weights exceed ~half the
                    per-generation VMEM budget); True/False to force.
    single_buffer_weights: single-buffer the grid-invariant operands.
    """
    B, L, d_in = x.shape
    d_hid = w1.shape[1]
    assert w1.shape == (d_in, d_hid) and w2.shape == (d_hid, d_in)
    assert b1.shape == (d_hid,) and b2.shape == (d_in,)
    assert gamma.shape == (d_in,) and beta.shape == (d_in,)

    kind = _device_kind()

    # Matmul dtype: bf16 weights + f32 accumulation when the caller passes f32.
    if matmul_dtype == "auto":
        mm_dtype = jnp.dtype(jnp.bfloat16) if w1.dtype == jnp.float32 \
            else jnp.dtype(w1.dtype)
    elif matmul_dtype is None:
        mm_dtype = jnp.dtype(w1.dtype)
    else:
        mm_dtype = jnp.dtype(matmul_dtype)
    mm_itemsize = mm_dtype.itemsize

    # Per-generation VMEM budget (v7x: 64 MiB physical; v5e/v6e: 128 MiB).
    if "v7" in kind:
        vmem_cap = 56 << 20
    elif ("v5" in kind) or ("v6" in kind):
        vmem_cap = 100 << 20
    else:
        vmem_cap = 56 << 20  # conservative for unknown parts
    if vmem_limit_bytes is None:
        vmem_limit_bytes = vmem_cap

    M = B * L
    row_align = 16 if x.dtype == jnp.bfloat16 else 8
    if tm is None:
        tm = 512 if "v6" in kind else 256

    d_in_p = _round_up(d_in, 128)

    # Resident-weight footprint (single-buffered) -> decide weight streaming.
    resident_w_bytes = 2 * d_in_p * _round_up(d_hid, 128) * mm_itemsize
    if stream_weights is None:
        stream_weights = resident_w_bytes > (vmem_cap // 2)

    tm = _pick_tm(_round_up(M, row_align), tm, row_align)
    M_p = _round_up(M, tm)

    if not stream_weights:
        d_hid_p = _round_up(d_hid, 128)
        # Bound the live (tm, d_hid_p) f32 intermediate via hidden chunking.
        if hidden_chunk is None and tm * d_hid_p * 4 > (12 << 20):
            hidden_chunk = 1024
        if hidden_chunk is not None:
            hidden_chunk = max(256, _round_up(hidden_chunk, 256))
        if hidden_chunk is None or hidden_chunk >= d_hid_p:
            chunk_bounds = ((0, d_hid_p),)
        else:
            chunk_bounds = tuple(
                (lo, min(lo + hidden_chunk, d_hid_p))
                for lo in range(0, d_hid_p, hidden_chunk))
    else:
        t_hid = max(256, _round_up(min(t_hid, _round_up(d_hid, 256)), 256))
        d_hid_p = _round_up(d_hid, t_hid)

    pad_rows = M_p - M
    pad_in = d_in_p - d_in
    pad_hid = d_hid_p - d_hid

    # Zero-pad only when needed (padded rows/lanes are sliced off below; zero
    # weight/bias padding keeps the math exact).
    x2d = x.reshape(M, d_in)
    if pad_rows or pad_in:
        x2d = jnp.pad(x2d, ((0, pad_rows), (0, pad_in)))

    w1p = w1.astype(mm_dtype)
    w2p = w2.astype(mm_dtype)
    if pad_in or pad_hid:
        w1p = jnp.pad(w1p, ((0, pad_in), (0, pad_hid)))
        w2p = jnp.pad(w2p, ((0, pad_hid), (0, pad_in)))
    b1p = (jnp.pad(b1, (0, pad_hid)) if pad_hid else b1).reshape(1, d_hid_p)
    b2p = (jnp.pad(b2, (0, pad_in)) if pad_in else b2).reshape(1, d_in_p)
    g2d = (jnp.pad(gamma, (0, pad_in)) if pad_in else gamma).reshape(1, d_in_p)
    be2d = (jnp.pad(beta, (0, pad_in)) if pad_in else beta).reshape(1, d_in_p)

    cost = pl.CostEstimate(
        flops=int(4 * M_p * d_in_p * d_hid_p),
        transcendentals=int(M_p),
        bytes_accessed=int(
            x2d.size * x2d.dtype.itemsize            # x in
            + M_p * d_in_p * x.dtype.itemsize        # out
            + (w1p.size + w2p.size) * mm_itemsize    # weights
            + (b1p.size + b2p.size + g2d.size + be2d.size) * 4))

    def _run(use_buffered):
        def const_spec(shape, index_map):
            # Grid-invariant operands: single buffer (double buffering a
            # constant-index operand only doubles its VMEM footprint).
            if use_buffered:
                return pl.BlockSpec(shape, index_map,
                                    pipeline_mode=pl.Buffered(1))
            return pl.BlockSpec(shape, index_map)

        if not stream_weights:
            kernel = functools.partial(
                _ffn_kernel, d_in=d_in, chunk_bounds=chunk_bounds,
                mm_dtype=mm_dtype)
            grid = (M_p // tm,)
            in_specs = [
                pl.BlockSpec((tm, d_in_p), lambda i: (i, 0)),       # x tile
                const_spec((d_in_p, d_hid_p), lambda i: (0, 0)),    # W1
                const_spec((1, d_hid_p), lambda i: (0, 0)),         # b1
                const_spec((d_hid_p, d_in_p), lambda i: (0, 0)),    # W2
                const_spec((1, d_in_p), lambda i: (0, 0)),          # b2
                const_spec((1, d_in_p), lambda i: (0, 0)),          # gamma
                const_spec((1, d_in_p), lambda i: (0, 0)),          # beta
            ]
            out_specs = pl.BlockSpec((tm, d_in_p), lambda i: (i, 0))
            scratch = []
            dims = ("parallel",)
        else:
            kernel = functools.partial(
                _ffn_stream_kernel, d_in=d_in, mm_dtype=mm_dtype)
            grid = (M_p // tm, d_hid_p // t_hid)
            in_specs = [
                pl.BlockSpec((tm, d_in_p), lambda i, k: (i, 0)),    # x tile
                pl.BlockSpec((d_in_p, t_hid), lambda i, k: (0, k)), # W1 tile
                pl.BlockSpec((1, t_hid), lambda i, k: (0, k)),      # b1 tile
                pl.BlockSpec((t_hid, d_in_p), lambda i, k: (k, 0)), # W2 tile
                const_spec((1, d_in_p), lambda i, k: (0, 0)),       # b2
                const_spec((1, d_in_p), lambda i, k: (0, 0)),       # gamma
                const_spec((1, d_in_p), lambda i, k: (0, 0)),       # beta
            ]
            out_specs = pl.BlockSpec((tm, d_in_p), lambda i, k: (i, 0))
            scratch = [pltpu.VMEM((tm, d_in_p), jnp.float32)]
            dims = ("parallel", "arbitrary")

        return pl.pallas_call(
            kernel,
            out_shape=jax.ShapeDtypeStruct((M_p, d_in_p), x.dtype),
            grid_spec=pltpu.PrefetchScalarGridSpec(
                num_scalar_prefetch=0,
                grid=grid,
                in_specs=in_specs,
                out_specs=out_specs,
                scratch_shapes=scratch,
            ),
            compiler_params=pltpu.CompilerParams(
                dimension_semantics=dims,
                vmem_limit_bytes=vmem_limit_bytes,
            ),
            cost_estimate=cost,
        )(x2d, w1p, b1p, w2p, b2p, g2d, be2d)

    try:
        out2d = _run(single_buffer_weights)
    except Exception:
        if not single_buffer_weights:
            raise
        # Fallback for environments where BlockSpec.pipeline_mode / Buffered
        # is unsupported: rerun with default (double) buffering.
        out2d = _run(False)

    if pad_rows or pad_in:
        out2d = out2d[:M, :d_in]
    return out2d.reshape(B, L, d_in)


def reference(x, w1, b1, w2, b2, gamma, beta):
    """Pure-JAX reference matching the PyTorch forward (dropout = identity)."""
    xf = x.astype(jnp.float32)
    h = jnp.maximum(xf @ w1.astype(jnp.float32) + b1, 0.0)
    y = h @ w2.astype(jnp.float32) + b2 + xf
    mean = jnp.mean(y, axis=-1, keepdims=True)
    var = jnp.mean((y - mean) ** 2, axis=-1, keepdims=True)
    return ((y - mean) * jax.lax.rsqrt(var + LN_EPS) * gamma + beta).astype(x.dtype)


def _make_params(key, d_in, d_hid):
    k1, kb1, k2, kb2, kg, kb = jax.random.split(key, 6)
    w1 = jax.random.normal(k1, (d_in, d_hid), jnp.float32) / jnp.sqrt(float(d_in))
    b1 = jax.random.normal(kb1, (d_hid,), jnp.float32) * 0.02
    w2 = jax.random.normal(k2, (d_hid, d_in), jnp.float32) / jnp.sqrt(float(d_hid))
    b2 = jax.random.normal(kb2, (d_in,), jnp.float32) * 0.02
    gamma = 1.0 + 0.1 * jax.random.normal(kg, (d_in,), jnp.float32)
    beta = 0.02 * jax.random.normal(kb, (d_in,), jnp.float32)
    return w1, b1, w2, b2, gamma, beta


if __name__ == "__main__":
    key = jax.random.PRNGKey(0)
    kx1, kp1, kx2, kp2, kx3, kp3, kx4, kp4 = jax.random.split(key, 8)

    # Test 1: lane-aligned dims, exact f32 matmuls (matmul_dtype=None).
    B, L, d_in, d_hid = 2, 8, 128, 256
    x = jax.random.normal(kx1, (B, L, d_in), jnp.float32)
    params = _make_params(kp1, d_in, d_hid)
    out = jax.block_until_ready(
        positionwise_feed_forward(x, *params, matmul_dtype=None))
    ref = reference(x, *params)
    assert out.shape == (B, L, d_in)
    assert jnp.allclose(out, ref, atol=2e-4, rtol=2e-4), "mismatch (aligned)"

    # Test 2: unaligned dims + ragged rows + hidden chunking with a ragged
    # last chunk (exercises padding and the K-split accumulator path).
    B, L, d_in, d_hid = 2, 9, 96, 320
    x = jax.random.normal(kx2, (B, L, d_in), jnp.float32)
    params = _make_params(kp2, d_in, d_hid)
    out = jax.block_until_ready(
        positionwise_feed_forward(x, *params, matmul_dtype=None,
                                  hidden_chunk=256))
    ref = reference(x, *params)
    assert out.shape == (B, L, d_in)
    assert jnp.allclose(out, ref, atol=2e-4, rtol=2e-4), "mismatch (padded)"

    # Test 3: forced weight-streaming path (2 hidden tiles) with the default
    # bf16 matmul dtype (looser tolerance vs. the f32 reference).
    B, L, d_in, d_hid = 2, 16, 128, 512
    x = jax.random.normal(kx3, (B, L, d_in), jnp.float32)
    params = _make_params(kp3, d_in, d_hid)
    out = jax.block_until_ready(
        positionwise_feed_forward(x, *params, stream_weights=True, t_hid=256))
    ref = reference(x, *params)
    assert out.shape == (B, L, d_in)
    assert jnp.allclose(out, ref, atol=5e-2, rtol=5e-2), "mismatch (streamed)"

    # Test 4: all defaults (resident bf16 weights, single-buffered constants).
    B, L, d_in, d_hid = 2, 64, 256, 1024
    x = jax.random.normal(kx4, (B, L, d_in), jnp.float32)
    params = _make_params(kp4, d_in, d_hid)
    out = jax.block_until_ready(positionwise_feed_forward(x, *params))
    ref = reference(x, *params)
    assert out.shape == (B, L, d_in)
    assert jnp.allclose(out, ref, atol=5e-2, rtol=5e-2), "mismatch (defaults)"

    print("KERNEL_OK")
</pallas_src>

<mosaic_0001>
module attributes {stable_mosaic.version = 11 : i64} {
  func.func @_ffn_kernel(%arg0: i32, %arg1: memref<16x128xf32, #tpu.memory_space<vmem>>, %arg2: memref<128x256xf32, #tpu.memory_space<vmem>>, %arg3: memref<1x256xf32, #tpu.memory_space<vmem>>, %arg4: memref<256x128xf32, #tpu.memory_space<vmem>>, %arg5: memref<1x128xf32, #tpu.memory_space<vmem>>, %arg6: memref<1x128xf32, #tpu.memory_space<vmem>>, %arg7: memref<1x128xf32, #tpu.memory_space<vmem>>, %arg8: memref<16x128xf32, #tpu.memory_space<vmem>>) attributes {dimension_semantics = [#tpu.dimension_semantics<parallel>], iteration_bounds = array<i64: 1>, scalar_prefetch = 0 : i64, scratch_operands = 0 : i64, tpu.core_type = #tpu.core_type<tc>, window_params = [{transform_indices = @transform_0, window_bounds = array<i64: 16, 128>}, {pipeline_mode = #tpu.pipeline_mode<synchronous>, transform_indices = @transform_1, window_bounds = array<i64: 128, 256>}, {pipeline_mode = #tpu.pipeline_mode<synchronous>, transform_indices = @transform_2, window_bounds = array<i64: 1, 256>}, {pipeline_mode = #tpu.pipeline_mode<synchronous>, transform_indices = @transform_3, window_bounds = array<i64: 256, 128>}, {pipeline_mode = #tpu.pipeline_mode<synchronous>, transform_indices = @transform_4, window_bounds = array<i64: 1, 128>}, {pipeline_mode = #tpu.pipeline_mode<synchronous>, transform_indices = @transform_5, window_bounds = array<i64: 1, 128>}, {pipeline_mode = #tpu.pipeline_mode<synchronous>, transform_indices = @transform_6, window_bounds = array<i64: 1, 128>}, {transform_indices = @transform_7, window_bounds = array<i64: 16, 128>}]} {
    %c0 = arith.constant 0 : index
    %c0_0 = arith.constant 0 : index
    %0 = vector.load %arg1[%c0, %c0_0] : memref<16x128xf32, #tpu.memory_space<vmem>>, vector<16x128xf32>
    %c0_1 = arith.constant 0 : index
    %c0_2 = arith.constant 0 : index
    %1 = vector.load %arg2[%c0_1, %c0_2] : memref<128x256xf32, #tpu.memory_space<vmem>>, vector<128x256xf32>
    %cst = arith.constant dense<0.000000e+00> : vector<16x256xf32>
    %2 = tpu.matmul %0, %1, %cst {dimension_numbers = #tpu.dot_dimension_numbers<[1], [0], [0], [1], [0, 0, 1, 1], [], []>} : vector<16x128xf32>, vector<128x256xf32>, vector<16x256xf32> -> vector<16x256xf32>
    %c0_3 = arith.constant 0 : index
    %c0_4 = arith.constant 0 : index
    %3 = vector.load %arg3[%c0_3, %c0_4] : memref<1x256xf32, #tpu.memory_space<vmem>>, vector<1x256xf32>
    %4 = vector.broadcast %3 : vector<1x256xf32> to vector<16x256xf32>
    %5 = arith.addf %2, %4 : vector<16x256xf32>
    %cst_5 = arith.constant 0.000000e+00 : f32
    %6 = vector.broadcast %cst_5 : f32 to vector<16x256xf32>
    %7 = arith.maximumf %5, %6 : vector<16x256xf32>
    %c0_6 = arith.constant 0 : index
    %c0_7 = arith.constant 0 : index
    %8 = vector.load %arg4[%c0_6, %c0_7] : memref<256x128xf32, #tpu.memory_space<vmem>>, vector<256x128xf32>
    %cst_8 = arith.constant dense<0.000000e+00> : vector<16x128xf32>
    %9 = tpu.matmul %7, %8, %cst_8 {dimension_numbers = #tpu.dot_dimension_numbers<[1], [0], [0], [1], [0, 0, 1, 1], [], []>} : vector<16x256xf32>, vector<256x128xf32>, vector<16x128xf32> -> vector<16x128xf32>
    %c0_9 = arith.constant 0 : index
    %c0_10 = arith.constant 0 : index
    %10 = vector.load %arg5[%c0_9, %c0_10] : memref<1x128xf32, #tpu.memory_space<vmem>>, vector<1x128xf32>
    %c0_11 = arith.constant 0 : index
    %c0_12 = arith.constant 0 : index
    %11 = vector.load %arg6[%c0_11, %c0_12] : memref<1x128xf32, #tpu.memory_space<vmem>>, vector<1x128xf32>
    %c0_13 = arith.constant 0 : index
    %c0_14 = arith.constant 0 : index
    %12 = vector.load %arg7[%c0_13, %c0_14] : memref<1x128xf32, #tpu.memory_space<vmem>>, vector<1x128xf32>
    %13 = vector.broadcast %10 : vector<1x128xf32> to vector<16x128xf32>
    %14 = arith.addf %9, %13 : vector<16x128xf32>
    %15 = arith.addf %14, %0 : vector<16x128xf32>
    %cst_15 = arith.constant dense<0.000000e+00> : vector<16xf32>
    %16 = vector.multi_reduction <add>, %15, %cst_15 [1] : vector<16x128xf32> to vector<16xf32>
    %17 = vector.shape_cast %16 : vector<16xf32> to vector<16x1xf32>
    %cst_16 = arith.constant 7.812500e-03 : f32
    %18 = vector.broadcast %cst_16 : f32 to vector<16x1xf32>
    %19 = arith.mulf %17, %18 : vector<16x1xf32>
    %20 = arith.mulf %15, %15 : vector<16x128xf32>
    %cst_17 = arith.constant dense<0.000000e+00> : vector<16xf32>
    %21 = vector.multi_reduction <add>, %20, %cst_17 [1] : vector<16x128xf32> to vector<16xf32>
    %22 = vector.shape_cast %21 : vector<16xf32> to vector<16x1xf32>
    %cst_18 = arith.constant 7.812500e-03 : f32
    %23 = vector.broadcast %cst_18 : f32 to vector<16x1xf32>
    %24 = arith.mulf %22, %23 : vector<16x1xf32>
    %25 = arith.mulf %19, %19 : vector<16x1xf32>
    %26 = arith.subf %24, %25 : vector<16x1xf32>
    %cst_19 = arith.constant 0.000000e+00 : f32
    %27 = vector.broadcast %cst_19 : f32 to vector<16x1xf32>
    %28 = arith.maximumf %26, %27 : vector<16x1xf32>
    %29 = vector.broadcast %19 : vector<16x1xf32> to vector<16x128xf32>
    %30 = arith.subf %15, %29 : vector<16x128xf32>
    %cst_20 = arith.constant 9.99999974E-6 : f32
    %31 = vector.broadcast %cst_20 : f32 to vector<16x1xf32>
    %32 = arith.addf %28, %31 : vector<16x1xf32>
    %33 = math.rsqrt %32 : vector<16x1xf32>
    %34 = vector.broadcast %33 : vector<16x1xf32> to vector<16x128xf32>
    %35 = arith.mulf %30, %34 : vector<16x128xf32>
    %36 = vector.broadcast %11 : vector<1x128xf32> to vector<16x128xf32>
    %37 = arith.mulf %35, %36 : vector<16x128xf32>
    %38 = vector.broadcast %12 : vector<1x128xf32> to vector<16x128xf32>
    %39 = arith.addf %37, %38 : vector<16x128xf32>
    %c0_21 = arith.constant 0 : index
    %c0_22 = arith.constant 0 : index
    %40 = vector.load %arg8[%c0_21, %c0_22] : memref<16x128xf32, #tpu.memory_space<vmem>>, vector<16x128xf32>
    tpu.vector_store %arg8[%c0_21, %c0_22], %39 {strides = array<i32>} : memref<16x128xf32, #tpu.memory_space<vmem>>, vector<16x128xf32>,
    return
  }
  func.func @transform_0(%arg0: i32) -> (i32, i32) {
    %c0_i32 = arith.constant 0 : i32
    %c0_i32_0 = arith.constant 0 : i32
    return %arg0, %c0_i32 : i32, i32
  }
  func.func @transform_1(%arg0: i32) -> (i32, i32) {
    %c0_i32 = arith.constant 0 : i32
    %c0_i32_0 = arith.constant 0 : i32
    %c0_i32_1 = arith.constant 0 : i32
    return %c0_i32, %c0_i32_0 : i32, i32
  }
  func.func @transform_2(%arg0: i32) -> (i32, i32) {
    %c0_i32 = arith.constant 0 : i32
    %c0_i32_0 = arith.constant 0 : i32
    %c0_i32_1 = arith.constant 0 : i32
    return %c0_i32, %c0_i32_0 : i32, i32
  }
  func.func @transform_3(%arg0: i32) -> (i32, i32) {
    %c0_i32 = arith.constant 0 : i32
    %c0_i32_0 = arith.constant 0 : i32
    %c0_i32_1 = arith.constant 0 : i32
    return %c0_i32, %c0_i32_0 : i32, i32
  }
  func.func @transform_4(%arg0: i32) -> (i32, i32) {
    %c0_i32 = arith.constant 0 : i32
    %c0_i32_0 = arith.constant 0 : i32
    %c0_i32_1 = arith.constant 0 : i32
    return %c0_i32, %c0_i32_0 : i32, i32
  }
  func.func @transform_5(%arg0: i32) -> (i32, i32) {
    %c0_i32 = arith.constant 0 : i32
    %c0_i32_0 = arith.constant 0 : i32
    %c0_i32_1 = arith.constant 0 : i32
    return %c0_i32, %c0_i32_0 : i32, i32
  }
  func.func @transform_6(%arg0: i32) -> (i32, i32) {
    %c0_i32 = arith.constant 0 : i32
    %c0_i32_0 = arith.constant 0 : i32
    %c0_i32_1 = arith.constant 0 : i32
    return %c0_i32, %c0_i32_0 : i32, i32
  }
  func.func @transform_7(%arg0: i32) -> (i32, i32) {
    %c0_i32 = arith.constant 0 : i32
    %c0_i32_0 = arith.constant 0 : i32
    return %arg0, %c0_i32 : i32, i32
  }
}

module attributes {stable_mosaic.version = 11 : i64} {
  func.func @_ffn_kernel(%arg0: i32, %arg1: memref<16x128xf32, #tpu.memory_space<vmem>>, %arg2: memref<128x256xf32, #tpu.memory_space<vmem>>, %arg3: memref<1x256xf32, #tpu.memory_space<vmem>>, %arg4: memref<256x128xf32, #tpu.memory_space<vmem>>, %arg5: memref<1x128xf32, #tpu.memory_space<vmem>>, %arg6: memref<1x128xf32, #tpu.memory_space<vmem>>, %arg7: memref<1x128xf32, #tpu.memory_space<vmem>>, %arg8: memref<16x128xf32, #tpu.memory_space<vmem>>) attributes {dimension_semantics = [#tpu.dimension_semantics<parallel>], iteration_bounds = array<i64: 1>, scalar_prefetch = 0 : i64, scratch_operands = 0 : i64, tpu.core_type = #tpu.core_type<tc>, window_params = [{transform_indices = @transform_0, window_bounds = array<i64: 16, 128>}, {pipeline_mode = #tpu.pipeline_mode<synchronous>, transform_indices = @transform_1, window_bounds = array<i64: 128, 256>}, {pipeline_mode = #tpu.pipeline_mode<synchronous>, transform_indices = @transform_2, window_bounds = array<i64: 1, 256>}, {pipeline_mode = #tpu.pipeline_mode<synchronous>, transform_indices = @transform_3, window_bounds = array<i64: 256, 128>}, {pipeline_mode = #tpu.pipeline_mode<synchronous>, transform_indices = @transform_4, window_bounds = array<i64: 1, 128>}, {pipeline_mode = #tpu.pipeline_mode<synchronous>, transform_indices = @transform_5, window_bounds = array<i64: 1, 128>}, {pipeline_mode = #tpu.pipeline_mode<synchronous>, transform_indices = @transform_6, window_bounds = array<i64: 1, 128>}, {transform_indices = @transform_7, window_bounds = array<i64: 16, 128>}]} {
    %c0 = arith.constant 0 : index
    %c0_0 = arith.constant 0 : index
    %0 = vector.load %arg1[%c0, %c0_0] : memref<16x128xf32, #tpu.memory_space<vmem>>, vector<16x128xf32>
    %c0_1 = arith.constant 0 : index
    %c0_2 = arith.constant 0 : index
    %1 = vector.load %arg2[%c0_1, %c0_2] : memref<128x256xf32, #tpu.memory_space<vmem>>, vector<128x256xf32>
    %cst = arith.constant dense<0.000000e+00> : vector<16x256xf32>
    %2 = tpu.matmul %0, %1, %cst {dimension_numbers = #tpu.dot_dimension_numbers<[1], [0], [0], [1], [0, 0, 1, 1], [], []>} : vector<16x128xf32>, vector<128x256xf32>, vector<16x256xf32> -> vector<16x256xf32>
    %c0_3 = arith.constant 0 : index
    %c0_4 = arith.constant 0 : index
    %3 = vector.load %arg3[%c0_3, %c0_4] : memref<1x256xf32, #tpu.memory_space<vmem>>, vector<1x256xf32>
    %4 = vector.broadcast %3 : vector<1x256xf32> to vector<16x256xf32>
    %5 = arith.addf %2, %4 : vector<16x256xf32>
    %cst_5 = arith.constant 0.000000e+00 : f32
    %6 = vector.broadcast %cst_5 : f32 to vector<16x256xf32>
    %7 = arith.maximumf %5, %6 : vector<16x256xf32>
    %c0_6 = arith.constant 0 : index
    %c0_7 = arith.constant 0 : index
    %8 = vector.load %arg4[%c0_6, %c0_7] : memref<256x128xf32, #tpu.memory_space<vmem>>, vector<256x128xf32>
    %cst_8 = arith.constant dense<0.000000e+00> : vector<16x128xf32>
    %9 = tpu.matmul %7, %8, %cst_8 {dimension_numbers = #tpu.dot_dimension_numbers<[1], [0], [0], [1], [0, 0, 1, 1], [], []>} : vector<16x256xf32>, vector<256x128xf32>, vector<16x128xf32> -> vector<16x128xf32>
    %c0_9 = arith.constant 0 : index
    %c0_10 = arith.constant 0 : index
    %10 = vector.load %arg5[%c0_9, %c0_10] : memref<1x128xf32, #tpu.memory_space<vmem>>, vector<1x128xf32>
    %c0_11 = arith.constant 0 : index
    %c0_12 = arith.constant 0 : index
    %11 = vector.load %arg6[%c0_11, %c0_12] : memref<1x128xf32, #tpu.memory_space<vmem>>, vector<1x128xf32>
    %c0_13 = arith.constant 0 : index
    %c0_14 = arith.constant 0 : index
    %12 = vector.load %arg7[%c0_13, %c0_14] : memref<1x128xf32, #tpu.memory_space<vmem>>, vector<1x128xf32>
    %13 = vector.broadcast %10 : vector<1x128xf32> to vector<16x128xf32>
    %14 = arith.addf %9, %13 : vector<16x128xf32>
    %15 = arith.addf %14, %0 : vector<16x128xf32>
    %cst_15 = arith.constant dense<0.000000e+00> : vector<16xf32>
    %16 = vector.multi_reduction <add>, %15, %cst_15 [1] : vector<16x128xf32> to vector<16xf32>
    %17 = vector.shape_cast %16 : vector<16xf32> to vector<16x1xf32>
    %cst_16 = arith.constant 7.812500e-03 : f32
    %18 = vector.broadcast %cst_16 : f32 to vector<16x1xf32>
    %19 = arith.mulf %17, %18 : vector<16x1xf32>
    %20 = arith.mulf %15, %15 : vector<16x128xf32>
    %cst_17 = arith.constant dense<0.000000e+00> : vector<16xf32>
    %21 = vector.multi_reduction <add>, %20, %cst_17 [1] : vector<16x128xf32> to vector<16xf32>
    %22 = vector.shape_cast %21 : vector<16xf32> to vector<16x1xf32>
    %cst_18 = arith.constant 7.812500e-03 : f32
    %23 = vector.broadcast %cst_18 : f32 to vector<16x1xf32>
    %24 = arith.mulf %22, %23 : vector<16x1xf32>
    %25 = arith.mulf %19, %19 : vector<16x1xf32>
    %26 = arith.subf %24, %25 : vector<16x1xf32>
    %cst_19 = arith.constant 0.000000e+00 : f32
    %27 = vector.broadcast %cst_19 : f32 to vector<16x1xf32>
    %28 = arith.maximumf %26, %27 : vector<16x1xf32>
    %29 = vector.broadcast %19 : vector<16x1xf32> to vector<16x128xf32>
    %30 = arith.subf %15, %29 : vector<16x128xf32>
    %cst_20 = arith.constant 9.99999974E-6 : f32
    %31 = vector.broadcast %cst_20 : f32 to vector<16x1xf32>
    %32 = arith.addf %28, %31 : vector<16x1xf32>
    %33 = math.rsqrt %32 : vector<16x1xf32>
    %34 = vector.broadcast %33 : vector<16x1xf32> to vector<16x128xf32>
    %35 = arith.mulf %30, %34 : vector<16x128xf32>
    %36 = vector.broadcast %11 : vector<1x128xf32> to vector<16x128xf32>
    %37 = arith.mulf %35, %36 : vector<16x128xf32>
    %38 = vector.broadcast %12 : vector<1x128xf32> to vector<16x128xf32>
    %39 = arith.addf %37, %38 : vector<16x128xf32>
    %c0_21 = arith.constant 0 : index
    %c0_22 = arith.constant 0 : index
    %40 = vector.load %arg8[%c0_21, %c0_22] : memref<16x128xf32, #tpu.memory_space<vmem>>, vector<16x128xf32>
    tpu.vector_store %arg8[%c0_21, %c0_22], %39 {strides = array<i32>} : memref<16x128xf32, #tpu.memory_space<vmem>>, vector<16x128xf32>,
    return
  }
  func.func @transform_0(%arg0: i32) -> (i32, i32) {
    %c0_i32 = arith.constant 0 : i32
    %c0_i32_0 = arith.constant 0 : i32
    return %arg0, %c0_i32 : i32, i32
  }
  func.func @transform_1(%arg0: i32) -> (i32, i32) {
    %c0_i32 = arith.constant 0 : i32
    %c0_i32_0 = arith.constant 0 : i32
    %c0_i32_1 = arith.constant 0 : i32
    return %c0_i32, %c0_i32_0 : i32, i32
  }
  func.func @transform_2(%arg0: i32) -> (i32, i32) {
    %c0_i32 = arith.constant 0 : i32
    %c0_i32_0 = arith.constant 0 : i32
    %c0_i32_1 = arith.constant 0 : i32
    return %c0_i32, %c0_i32_0 : i32, i32
  }
  func.func @transform_3(%arg0: i32) -> (i32, i32) {
    %c0_i32 = arith.constant 0 : i32
    %c0_i32_0 = arith.constant 0 : i32
    %c0_i32_1 = arith.constant 0 : i32
    return %c0_i32, %c0_i32_0 : i32, i32
  }
  func.func @transform_4(%arg0: i32) -> (i32, i32) {
    %c0_i32 = arith.constant 0 : i32
    %c0_i32_0 = arith.constant 0 : i32
    %c0_i32_1 = arith.constant 0 : i32
    return %c0_i32, %c0_i32_0 : i32, i32
  }
  func.func @transform_5(%arg0: i32) -> (i32, i32) {
    %c0_i32 = arith.constant 0 : i32
    %c0_i32_0 = arith.constant 0 : i32
    %c0_i32_1 = arith.constant 0 : i32
    return %c0_i32, %c0_i32_0 : i32, i32
  }
  func.func @transform_6(%arg0: i32) -> (i32, i32) {
    %c0_i32 = arith.constant 0 : i32
    %c0_i32_0 = arith.constant 0 : i32
    %c0_i32_1 = arith.constant 0 : i32
    return %c0_i32, %c0_i32_0 : i32, i32
  }
  func.func @transform_7(%arg0: i32) -> (i32, i32) {
    %c0_i32 = arith.constant 0 : i32
    %c0_i32_0 = arith.constant 0 : i32
    return %arg0, %c0_i32 : i32, i32
  }
}

</mosaic_0001>

<llo_original>
// kernel: tpu_custom_call.1
$region0: #{tpu_custom_call.1}
  #allocation0 [shape = 'u32[]', space=smem, size = 0x4, offset = 0x4, fixed_abs, tag = 'smem constant byte address 0x4 - core index']
  #allocation1 [shape = 'u32[144,128]{1,0:T(1,128)}', space=vmem, size = 0x12000, scoped, tag = 'internal scratch']
  %s0 = inlined_call_operand.hbm [shape: f32[16,128], index: 0, kind: input, shape index: {}]
  %s1 = inlined_call_operand.hbm [shape: f32[128,256], index: 1, kind: input, shape index: {}]
  %s2 = inlined_call_operand.vmem [shape: f32[1,256], index: 2, kind: input, shape index: {}]
  %s3 = inlined_call_operand.hbm [shape: f32[256,128], index: 3, kind: input, shape index: {}]
  %s4 = inlined_call_operand.vmem [shape: f32[1,128], index: 4, kind: input, shape index: {}]
  %s5 = inlined_call_operand.vmem [shape: f32[1,128], index: 5, kind: input, shape index: {}]
  %s6 = inlined_call_operand.vmem [shape: f32[1,128], index: 6, kind: input, shape index: {}]
  %s7 = inlined_call_operand.hbm [shape: f32[16,128], index: 7, kind: output, shape index: {}]
  %s8 = sld [smem:[#allocation0]]
  $region50: #{tpu_custom_call.1} parent=0
    _
  %s10 = ssub.s32 1, %s8
  %s11 = scalar_select 0, %s10, %s8
  $region1: #{tpu_custom_call.1} parent=0
    #allocation2 [shape = 'u8[8192]{0}', space=vmem, size = 0x2000, scoped, tag = 'input window, operand 0, single buffered']
    #allocation3 [shape = 's32[1]{0}', space=sflag, size = 0x4, scoped, tag = 'scoped memory for tpu_custom_call.1']
    #allocation4 [shape = 's32[1]{0}', space=sflag, size = 0x4, scoped, tag = 'scoped memory for tpu_custom_call.1']
    #allocation5 [shape = 'u8[131072]{0}', space=vmem, size = 0x20000, scoped, tag = 'input window, operand 1, single buffered']
    #allocation6 [shape = 's32[1]{0}', space=sflag, size = 0x4, scoped, tag = 'scoped memory for tpu_custom_call.1']
    #allocation7 [shape = 'u8[131072]{0}', space=vmem, size = 0x20000, scoped, tag = 'input window, operand 3, single buffered']
    #allocation8 [shape = 'u8[8192]{0}', space=vmem, size = 0x2000, scoped, tag = 'output window, operand 0, single buffered']
    %12 = vsyncpa [#allocation3], 0
    %13 = vsyncpa [#allocation6], 0
    %14 = vsyncpa [#allocation4], 0
    // Predicated region
    $region2: #{tpu_custom_call.1} parent=1 // pred_check
      _
    $region3: #{tpu_custom_call.1} parent=1 // pred_check_branch
      %16 = sbr.rel (0) target = $region5
    $region4: #{tpu_custom_call.1} parent=1 // pred_region
      %s18 = ssub.s32 256, 256
      %19 = vsyncadd [#allocation3], %s18
      %s20 = sshll.u32 [#allocation2], 4
      %s21 = int_to_ptr.vmem [resolvable:$true] %s20
      %26 = dma.hbm_to_vmem [thread:$0]  %s0, 256, %s21, [#allocation3], 128, 128, 8
    $region5: #{tpu_custom_call.1} parent=1 // pred_fallthru
      _
    // Predicated region
    $region6: #{tpu_custom_call.1} parent=1 // pred_check
      _
    $region7: #{tpu_custom_call.1} parent=1 // pred_check_branch
      %28 = sbr.rel (0) target = $region9
    $region8: #{tpu_custom_call.1} parent=1 // pred_region
      %s30 = ssub.s32 4096, 4096
      %31 = vsyncadd [#allocation6], %s30
      %s32 = sshll.u32 [#allocation5], 4
      %s33 = int_to_ptr.vmem [resolvable:$true] %s32
      %38 = dma.hbm_to_vmem [thread:$0]  %s1, 4096, %s33, [#allocation6], 256, 256, 16
    $region9: #{tpu_custom_call.1} parent=1 // pred_fallthru
      _
    // Predicated region
    $region10: #{tpu_custom_call.1} parent=1 // pred_check
      _
    $region11: #{tpu_custom_call.1} parent=1 // pred_check_branch
      %40 = sbr.rel (0) target = $region13
    $region12: #{tpu_custom_call.1} parent=1 // pred_region
      _
    $region13: #{tpu_custom_call.1} parent=1 // pred_fallthru
      _
    // Predicated region
    $region14: #{tpu_custom_call.1} parent=1 // pred_check
      _
    $region15: #{tpu_custom_call.1} parent=1 // pred_check_branch
      %42 = sbr.rel (0) target = $region17
    $region16: #{tpu_custom_call.1} parent=1 // pred_region
      %s44 = ssub.s32 4096, 4096
      %45 = vsyncadd [#allocation6], %s44
      %s46 = sshll.u32 [#allocation7], 4
      %s47 = int_to_ptr.vmem [resolvable:$true] %s46
      %52 = dma.hbm_to_vmem [thread:$0]  %s3, 4096, %s47, [#allocation6], 128, 128, 8
    $region17: #{tpu_custom_call.1} parent=1 // pred_fallthru
      _
    // Predicated region
    $region18: #{tpu_custom_call.1} parent=1 // pred_check
      _
    $region19: #{tpu_custom_call.1} parent=1 // pred_check_branch
      %54 = sbr.rel (0) target = $region21
    $region20: #{tpu_custom_call.1} parent=1 // pred_region
      _
    $region21: #{tpu_custom_call.1} parent=1 // pred_fallthru
      _
    // Predicated region
    $region22: #{tpu_custom_call.1} parent=1 // pred_check
      _
    $region23: #{tpu_custom_call.1} parent=1 // pred_check_branch
      %56 = sbr.rel (0) target = $region25
    $region24: #{tpu_custom_call.1} parent=1 // pred_region
      _
    $region25: #{tpu_custom_call.1} parent=1 // pred_fallthru
      _
    // Predicated region
    $region26: #{tpu_custom_call.1} parent=1 // pred_check
      _
    $region27: #{tpu_custom_call.1} parent=1 // pred_check_branch
      %58 = sbr.rel (0) target = $region29
    $region28: #{tpu_custom_call.1} parent=1 // pred_region
      _
    $region29: #{tpu_custom_call.1} parent=1 // pred_fallthru
      _
    // Predicated region
    $region30: #{tpu_custom_call.1} parent=1 // pred_check
      _
    $region31: #{tpu_custom_call.1} parent=1 // pred_check_branch
      %60 = sbr.rel (0) target = $region33
    $region32: #{tpu_custom_call.1} parent=1 // pred_region
      %61 = dma.done [#allocation3], 256
    $region33: #{tpu_custom_call.1} parent=1 // pred_fallthru
      _
    // Predicated region
    $region34: #{tpu_custom_call.1} parent=1 // pred_check
      _
    $region35: #{tpu_custom_call.1} parent=1 // pred_check_branch
      %63 = sbr.rel (0) target = $region37
    $region36: #{tpu_custom_call.1} parent=1 // pred_region
      %64 = dma.done [#allocation6], 4096
    $region37: #{tpu_custom_call.1} parent=1 // pred_fallthru
      _
    // Predicated region
    $region38: #{tpu_custom_call.1} parent=1 // pred_check
      _
    $region39: #{tpu_custom_call.1} parent=1 // pred_check_branch
      %66 = sbr.rel (0) target = $region41
    $region40: #{tpu_custom_call.1} parent=1 // pred_region
      %67 = dma.done [#allocation6], 4096
    $region41: #{tpu_custom_call.1} parent=1 // pred_fallthru
      _
    %v68 = vld [vmem:[#allocation2] sm:$0xff]
    %v69 = vld [vmem:[#allocation2 + $0x8] sm:$0xff]
    %v70 = vld [vmem:[#allocation5] sm:$0xff]
    %v71 = vld [vmem:[#allocation5 + $0x8] sm:$0xff]
    %v72 = vld [vmem:[#allocation5 + $0x10] sm:$0xff]
    %v73 = vld [vmem:[#allocation5 + $0x18] sm:$0xff]
    %v74 = vld [vmem:[#allocation5 + $0x20] sm:$0xff]
    %v75 = vld [vmem:[#allocation5 + $0x28] sm:$0xff]
    %v76 = vld [vmem:[#allocation5 + $0x30] sm:$0xff]
    %v77 = vld [vmem:[#allocation5 + $0x38] sm:$0xff]
    %v78 = vld [vmem:[#allocation5 + $0x40] sm:$0xff]
    %v79 = vld [vmem:[#allocation5 + $0x48] sm:$0xff]
    %v80 = vld [vmem:[#allocation5 + $0x50] sm:$0xff]
    %v81 = vld [vmem:[#allocation5 + $0x58] sm:$0xff]
    %v82 = vld [vmem:[#allocation5 + $0x60] sm:$0xff]
    %v83 = vld [vmem:[#allocation5 + $0x68] sm:$0xff]
    %v84 = vld [vmem:[#allocation5 + $0x70] sm:$0xff]
    %v85 = vld [vmem:[#allocation5 + $0x78] sm:$0xff]
    %v86 = vld [vmem:[#allocation5 + $0x80] sm:$0xff]
    %v87 = vld [vmem:[#allocation5 + $0x88] sm:$0xff]
    %v88 = vld [vmem:[#allocation5 + $0x90] sm:$0xff]
    %v89 = vld [vmem:[#allocation5 + $0x98] sm:$0xff]
    %v90 = vld [vmem:[#allocation5 + $0xa0] sm:$0xff]
    %v91 = vld [vmem:[#allocation5 + $0xa8] sm:$0xff]
    %v92 = vld [vmem:[#allocation5 + $0xb0] sm:$0xff]
    %v93 = vld [vmem:[#allocation5 + $0xb8] sm:$0xff]
    %v94 = vld [vmem:[#allocation5 + $0xc0] sm:$0xff]
    %v95 = vld [vmem:[#allocation5 + $0xc8] sm:$0xff]
    %v96 = vld [vmem:[#allocation5 + $0xd0] sm:$0xff]
    %v97 = vld [vmem:[#allocation5 + $0xd8] sm:$0xff]
    %v98 = vld [vmem:[#allocation5 + $0xe0] sm:$0xff]
    %v99 = vld [vmem:[#allocation5 + $0xe8] sm:$0xff]
    %v100 = vld [vmem:[#allocation5 + $0xf0] sm:$0xff]
    %v101 = vld [vmem:[#allocation5 + $0xf8] sm:$0xff]
    %v102 = vld [vmem:[%s2] sm:$0x3]
    %v104 = vlaneseq
    %v105 = vshrl.u32 %v104, 7
    %v106 = vsub.s32 0, %v105
    %v107 = vrot.slane %v102, %v106
    %v108 = vlaneseq
    %v109 = vshrl.u32 %v108, 7
    %v110 = vsub.s32 1, %v109
    %v111 = vrot.slane %v102, %v110
    %114 = vmatprep.subr.mxu0 %v71
    %115 = vmatpush1.msra.mxu0 %v70
    %116 = vmatprep.subr.mxu0 %v73
    %117 = vmatpush1.msra.mxu0 %v72
    %118 = vmatprep.subr.mxu0 %v75
    %119 = vmatpush1.msra.mxu0 %v74
    %120 = vmatprep.subr.mxu0 %v77
    %121 = vmatpush1.msra.mxu0 %v76
    %122 = vmatprep.subr.mxu0 %v79
    %123 = vmatpush1.msra.mxu0 %v78
    %124 = vmatprep.subr.mxu0 %v81
    %125 = vmatpush1.msra.mxu0 %v80
    %126 = vmatprep.subr.mxu0 %v83
    %127 = vmatpush1.msra.mxu0 %v82
    %128 = vmatprep.subr.mxu0 %v85
    %129 = vmatpush1.msra.mxu0 %v84
    %130 = vmatprep.subr.mxu0 %v87
    %131 = vmatpush1.msra.mxu0 %v86
    %132 = vmatprep.subr.mxu0 %v89
    %133 = vmatpush1.msra.mxu0 %v88
    %134 = vmatprep.subr.mxu0 %v91
    %135 = vmatpush1.msra.mxu0 %v90
    %136 = vmatprep.subr.mxu0 %v93
    %137 = vmatpush1.msra.mxu0 %v92
    %138 = vmatprep.subr.mxu0 %v95
    %139 = vmatpush1.msra.mxu0 %v94
    %140 = vmatprep.subr.mxu0 %v97
    %141 = vmatpush1.msra.mxu0 %v96
    %142 = vmatprep.subr.mxu0 %v99
    %143 = vmatpush1.msra.mxu0 %v98
    %144 = vmatprep.subr.mxu0 %v101
    %145 = vmatpush1.msra.mxu0 %v100
    %146 = vmatprep.subr.mxu0 0.0
    %147 = vmatpush1.msra.mxu0 0.0
    %148 = vmatprep.subr.mxu0 0.0
    %149 = vmatpush1.msra.mxu0 0.0
    %150 = vmatprep.subr.mxu0 0.0
    %151 = vmatpush1.msra.mxu0 0.0
    %152 = vmatprep.subr.mxu0 0.0
    %153 = vmatpush1.msra.mxu0 0.0
    %154 = vmatprep.subr.mxu0 0.0
    %155 = vmatpush1.msra.mxu0 0.0
    %156 = vmatprep.subr.mxu0 0.0
    %157 = vmatpush1.msra.mxu0 0.0
    %158 = vmatprep.subr.mxu0 0.0
    %159 = vmatpush1.msra.mxu0 0.0
    %160 = vmatprep.subr.mxu0 0.0
    %161 = vmatpush1.msra.mxu0 0.0
    %162 = vmatprep.subr.mxu0 0.0
    %163 = vmatpush1.msra.mxu0 0.0
    %164 = vmatprep.subr.mxu0 0.0
    %165 = vmatpush1.msra.mxu0 0.0
    %166 = vmatprep.subr.mxu0 0.0
    %167 = vmatpush1.msra.mxu0 0.0
    %168 = vmatprep.subr.mxu0 0.0
    %169 = vmatpush1.msra.mxu0 0.0
    %170 = vmatprep.subr.mxu0 0.0
    %171 = vmatpush1.msra.mxu0 0.0
    %172 = vmatprep.subr.mxu0 0.0
    %173 = vmatpush1.msra.mxu0 0.0
    %174 = vmatprep.subr.mxu0 0.0
    %175 = vmatpush1.msra.mxu0 0.0
    %176 = vmatprep.subr.mxu0 0.0
    %177 = vmatpush1.msra.mxu0 0.0
    %178 = vmatprep.mubr.f32.mxu0 0.0
    %179 = vmatmul.mubr.f32.gmra.mrb[0].mxu0 %v68
    %v180 = vpop.f32.mrb[0].mxu0
    %v181 = vadd.f32 %v107, %v180
    %v182 = vpop.f32.mrb[0].mxu0
    %v183 = vadd.f32 %v111, %v182
    %184 = vmatprep.mubr.f32.mxu0 0.0
    %185 = vmatmul.mubr.f32.gmra.mrb[0].mxu0 %v69
    %v186 = vpop.f32.mrb[0].mxu0
    %v187 = vadd.f32 %v107, %v186
    %v188 = vpop.f32.mrb[0].mxu0
    %v189 = vadd.f32 %v111, %v188
    %190 = vdwg.mxu0
    %v191 = vmax.f32 %v181, 0.0
    %v192 = vmax.f32 %v183, 0.0
    %v193 = vmax.f32 %v187, 0.0
    %v194 = vmax.f32 %v189, 0.0
    %v195 = vld [vmem:[#allocation7] sm:$0xff]
    %v196 = vld [vmem:[#allocation7 + $0x8] sm:$0xff]
    %v197 = vld [vmem:[#allocation7 + $0x10] sm:$0xff]
    %v198 = vld [vmem:[#allocation7 + $0x18] sm:$0xff]
    %v199 = vld [vmem:[#allocation7 + $0x20] sm:$0xff]
    %v200 = vld [vmem:[#allocation7 + $0x28] sm:$0xff]
    %v201 = vld [vmem:[#allocation7 + $0x30] sm:$0xff]
    %v202 = vld [vmem:[#allocation7 + $0x38] sm:$0xff]
    %v203 = vld [vmem:[#allocation7 + $0x40] sm:$0xff]
    %v204 = vld [vmem:[#allocation7 + $0x48] sm:$0xff]
    %v205 = vld [vmem:[#allocation7 + $0x50] sm:$0xff]
    %v206 = vld [vmem:[#allocation7 + $0x58] sm:$0xff]
    %v207 = vld [vmem:[#allocation7 + $0x60] sm:$0xff]
    %v208 = vld [vmem:[#allocation7 + $0x68] sm:$0xff]
    %v209 = vld [vmem:[#allocation7 + $0x70] sm:$0xff]
    %v210 = vld [vmem:[#allocation7 + $0x78] sm:$0xff]
    %v211 = vld [vmem:[#allocation7 + $0x80] sm:$0xff]
    %v212 = vld [vmem:[#allocation7 + $0x88] sm:$0xff]
    %v213 = vld [vmem:[#allocation7 + $0x90] sm:$0xff]
    %v214 = vld [vmem:[#allocation7 + $0x98] sm:$0xff]
    %v215 = vld [vmem:[#allocation7 + $0xa0] sm:$0xff]
    %v216 = vld [vmem:[#allocation7 + $0xa8] sm:$0xff]
    %v217 = vld [vmem:[#allocation7 + $0xb0] sm:$0xff]
    %v218 = vld [vmem:[#allocation7 + $0xb8] sm:$0xff]
    %v219 = vld [vmem:[#allocation7 + $0xc0] sm:$0xff]
    %v220 = vld [vmem:[#allocation7 + $0xc8] sm:$0xff]
    %v221 = vld [vmem:[#allocation7 + $0xd0] sm:$0xff]
    %v222 = vld [vmem:[#allocation7 + $0xd8] sm:$0xff]
    %v223 = vld [vmem:[#allocation7 + $0xe0] sm:$0xff]
    %v224 = vld [vmem:[#allocation7 + $0xe8] sm:$0xff]
    %v225 = vld [vmem:[#allocation7 + $0xf0] sm:$0xff]
    %v226 = vld [vmem:[#allocation7 + $0xf8] sm:$0xff]
    %v227 = vld [vmem:[%s4] sm:$0x1]
    %v228 = vld [vmem:[%s5] sm:$0x1]
    %v229 = vld [vmem:[%s6] sm:$0x1]
    %v231 = vlaneseq
    %v232 = vshrl.u32 %v231, 7
    %v233 = vsub.s32 0, %v232
    %v234 = vrot.slane %v227, %v233
    %236 = vmatprep.subr.mxu0 0.0
    %237 = vmatpush1.msra.mxu0 %v195
    %238 = vmatprep.subr.mxu0 0.0
    %239 = vmatpush1.msra.mxu0 %v196
    %240 = vmatprep.subr.mxu0 0.0
    %241 = vmatpush1.msra.mxu0 %v197
    %242 = vmatprep.subr.mxu0 0.0
    %243 = vmatpush1.msra.mxu0 %v198
    %244 = vmatprep.subr.mxu0 0.0
    %245 = vmatpush1.msra.mxu0 %v199
    %246 = vmatprep.subr.mxu0 0.0
    %247 = vmatpush1.msra.mxu0 %v200
    %248 = vmatprep.subr.mxu0 0.0
    %249 = vmatpush1.msra.mxu0 %v201
    %250 = vmatprep.subr.mxu0 0.0
    %251 = vmatpush1.msra.mxu0 %v202
    %252 = vmatprep.subr.mxu0 0.0
    %253 = vmatpush1.msra.mxu0 %v203
    %254 = vmatprep.subr.mxu0 0.0
    %255 = vmatpush1.msra.mxu0 %v204
    %256 = vmatprep.subr.mxu0 0.0
    %257 = vmatpush1.msra.mxu0 %v205
    %258 = vmatprep.subr.mxu0 0.0
    %259 = vmatpush1.msra.mxu0 %v206
    %260 = vmatprep.subr.mxu0 0.0
    %261 = vmatpush1.msra.mxu0 %v207
    %262 = vmatprep.subr.mxu0 0.0
    %263 = vmatpush1.msra.mxu0 %v208
    %264 = vmatprep.subr.mxu0 0.0
    %265 = vmatpush1.msra.mxu0 %v209
    %266 = vmatprep.subr.mxu0 0.0
    %267 = vmatpush1.msra.mxu0 %v210
    %268 = vmatprep.subr.mxu0 0.0
    %269 = vmatpush1.msra.mxu0 %v211
    %270 = vmatprep.subr.mxu0 0.0
    %271 = vmatpush1.msra.mxu0 %v212
    %272 = vmatprep.subr.mxu0 0.0
    %273 = vmatpush1.msra.mxu0 %v213
    %274 = vmatprep.subr.mxu0 0.0
    %275 = vmatpush1.msra.mxu0 %v214
    %276 = vmatprep.subr.mxu0 0.0
    %277 = vmatpush1.msra.mxu0 %v215
    %278 = vmatprep.subr.mxu0 0.0
    %279 = vmatpush1.msra.mxu0 %v216
    %280 = vmatprep.subr.mxu0 0.0
    %281 = vmatpush1.msra.mxu0 %v217
    %282 = vmatprep.subr.mxu0 0.0
    %283 = vmatpush1.msra.mxu0 %v218
    %284 = vmatprep.subr.mxu0 0.0
    %285 = vmatpush1.msra.mxu0 %v219
    %286 = vmatprep.subr.mxu0 0.0
    %287 = vmatpush1.msra.mxu0 %v220
    %288 = vmatprep.subr.mxu0 0.0
    %289 = vmatpush1.msra.mxu0 %v221
    %290 = vmatprep.subr.mxu0 0.0
    %291 = vmatpush1.msra.mxu0 %v222
    %292 = vmatprep.subr.mxu0 0.0
    %293 = vmatpush1.msra.mxu0 %v223
    %294 = vmatprep.subr.mxu0 0.0
    %295 = vmatpush1.msra.mxu0 %v224
    %296 = vmatprep.subr.mxu0 0.0
    %297 = vmatpush1.msra.mxu0 %v225
    %298 = vmatprep.subr.mxu0 0.0
    %299 = vmatpush1.msra.mxu0 %v226
    %300 = vmatprep.mubr.f32.mxu0 %v192
    %301 = vmatmul.mubr.f32.gmra.mrb[0].mxu0 %v191
    %v302 = vpop.f32.mrb[0].mxu0
    %v303 = vadd.f32 %v234, %v302
    %v304 = vpop.f32.mrb[0].mxu0
    %305 = vmatprep.mubr.f32.mxu0 %v194
    %306 = vmatmul.mubr.f32.gmra.mrb[0].mxu0 %v193
    %v307 = vpop.f32.mrb[0].mxu0
    %v308 = vadd.f32 %v234, %v307
    %v309 = vpop.f32.mrb[0].mxu0
    %310 = vdwg.mxu0
    %v311 = vadd.f32 %v303, %v68
    %v312 = vadd.f32 %v308, %v69
    %313 = vadd.xlane.f32.xlu0 %v311
    %v314 = vpop.xlane.xlu0 %313
    %315 = vadd.xlane.f32.xlu0 %v312
    %v316 = vpop.xlane.xlu0 %315
    %v317 = vmul.f32 %v314, 0.0078125
    %v318 = vmul.f32 %v316, 0.0078125
    %v319 = vmul.f32 %v311, %v311
    %v320 = vmul.f32 %v312, %v312
    %321 = vadd.xlane.f32.xlu0 %v319
    %v322 = vpop.xlane.xlu0 %321
    %323 = vadd.xlane.f32.xlu0 %v320
    %v324 = vpop.xlane.xlu0 %323
    %v325 = vmul.f32 %v322, 0.0078125
    %v326 = vmul.f32 %v324, 0.0078125
    %v327 = vmul.f32 %v317, %v317
    %v328 = vmul.f32 %v318, %v318
    %v329 = vsub.f32 %v325, %v327
    %v330 = vsub.f32 %v326, %v328
    %v331 = vmax.f32 %v329, 0.0
    %v332 = vmax.f32 %v330, 0.0
    %v333 = vsub.f32 %v311, %v317
    %v334 = vsub.f32 %v312, %v318
    %v335 = vadd.f32 %v331, 1e-05
    %v336 = vadd.f32 %v332, 1e-05
    %v337 = vrsqrt.pop %v335
    %v338 = vrsqrt.pop %v336
    %v339 = vmul.f32 %v333, %v337
    %v340 = vmul.f32 %v334, %v338
    %v342 = vlaneseq
    %v343 = vshrl.u32 %v342, 7
    %v344 = vsub.s32 0, %v343
    %v345 = vrot.slane %v228, %v344
    %v347 = vmul.f32 %v339, %v345
    %v348 = vmul.f32 %v340, %v345
    %v350 = vlaneseq
    %v351 = vshrl.u32 %v350, 7
    %v352 = vsub.s32 0, %v351
    %v353 = vrot.slane %v229, %v352
    %v355 = vadd.f32 %v347, %v353
    %v356 = vadd.f32 %v348, %v353
    %357 = vst [vmem:[#allocation8] sm:$0xff] %v355
    %358 = vst [vmem:[#allocation8 + $0x8] sm:$0xff] %v356
    // Predicated region
    $region42: #{tpu_custom_call.1} parent=1 // pred_check
      _
    $region43: #{tpu_custom_call.1} parent=1 // pred_check_branch
      %360 = sbr.rel (0) target = $region45
    $region44: #{tpu_custom_call.1} parent=1 // pred_region
      %s362 = ssub.s32 256, 256
      %363 = vsyncadd [#allocation4], %s362
      %s364 = sshll.u32 [#allocation8], 4
      %s365 = int_to_ptr.vmem [resolvable:$true] %s364
      %370 = dma.vmem_to_hbm [thread:$0]  %s365, 256, %s7, [#allocation4], 128, 128, 8
    $region45: #{tpu_custom_call.1} parent=1 // pred_fallthru
      _
    // Predicated region
    $region46: #{tpu_custom_call.1} parent=1 // pred_check
      _
    $region47: #{tpu_custom_call.1} parent=1 // pred_check_branch
      %372 = sbr.rel (0) target = $region49
    $region48: #{tpu_custom_call.1} parent=1 // pred_region
      %373 = dma.done [#allocation4], 256
    $region49: #{tpu_custom_call.1} parent=1 // pred_fallthru
      _
    %374 = vsyncpa [#allocation3], 1
    %375 = vsyncpa [#allocation6], 1
    %376 = vsyncpa [#allocation4], 1

// kernel: tpu_custom_call.1
$region0: #{tpu_custom_call.1}
  #allocation0 [shape = 'u32[]', space=smem, size = 0x4, offset = 0x4, fixed_abs, tag = 'smem constant byte address 0x4 - core index']
  #allocation1 [shape = 'u32[144,128]{1,0:T(1,128)}', space=vmem, size = 0x12000, scoped, tag = 'internal scratch']
  %s0 = inlined_call_operand.hbm [shape: f32[16,128], index: 0, kind: input, shape index: {}]
  %s1 = inlined_call_operand.hbm [shape: f32[128,256], index: 1, kind: input, shape index: {}]
  %s2 = inlined_call_operand.vmem [shape: f32[1,256], index: 2, kind: input, shape index: {}]
  %s3 = inlined_call_operand.hbm [shape: f32[256,128], index: 3, kind: input, shape index: {}]
  %s4 = inlined_call_operand.vmem [shape: f32[1,128], index: 4, kind: input, shape index: {}]
  %s5 = inlined_call_operand.vmem [shape: f32[1,128], index: 5, kind: input, shape index: {}]
  %s6 = inlined_call_operand.vmem [shape: f32[1,128], index: 6, kind: input, shape index: {}]
  %s7 = inlined_call_operand.hbm [shape: f32[16,128], index: 7, kind: output, shape index: {}]
  %s8 = sld [smem:[#allocation0]]
  $region50: #{tpu_custom_call.1} parent=0
    _
  %s10 = ssub.s32 1, %s8
  %s11 = scalar_select 0, %s10, %s8
  $region1: #{tpu_custom_call.1} parent=0
    #allocation2 [shape = 'u8[8192]{0}', space=vmem, size = 0x2000, scoped, tag = 'input window, operand 0, single buffered']
    #allocation3 [shape = 's32[1]{0}', space=sflag, size = 0x4, scoped, tag = 'scoped memory for tpu_custom_call.1']
    #allocation4 [shape = 's32[1]{0}', space=sflag, size = 0x4, scoped, tag = 'scoped memory for tpu_custom_call.1']
    #allocation5 [shape = 'u8[131072]{0}', space=vmem, size = 0x20000, scoped, tag = 'input window, operand 1, single buffered']
    #allocation6 [shape = 's32[1]{0}', space=sflag, size = 0x4, scoped, tag = 'scoped memory for tpu_custom_call.1']
    #allocation7 [shape = 'u8[131072]{0}', space=vmem, size = 0x20000, scoped, tag = 'input window, operand 3, single buffered']
    #allocation8 [shape = 'u8[8192]{0}', space=vmem, size = 0x2000, scoped, tag = 'output window, operand 0, single buffered']
    %12 = vsyncpa [#allocation3], 0
    %13 = vsyncpa [#allocation6], 0
    %14 = vsyncpa [#allocation4], 0
    // Predicated region
    $region2: #{tpu_custom_call.1} parent=1 // pred_check
      _
    $region3: #{tpu_custom_call.1} parent=1 // pred_check_branch
      %16 = sbr.rel (0) target = $region5
    $region4: #{tpu_custom_call.1} parent=1 // pred_region
      %s18 = ssub.s32 256, 256
      %19 = vsyncadd [#allocation3], %s18
      %s20 = sshll.u32 [#allocation2], 4
      %s21 = int_to_ptr.vmem [resolvable:$true] %s20
      %26 = dma.hbm_to_vmem [thread:$0]  %s0, 256, %s21, [#allocation3], 128, 128, 8
    $region5: #{tpu_custom_call.1} parent=1 // pred_fallthru
      _
    // Predicated region
    $region6: #{tpu_custom_call.1} parent=1 // pred_check
      _
    $region7: #{tpu_custom_call.1} parent=1 // pred_check_branch
      %28 = sbr.rel (0) target = $region9
    $region8: #{tpu_custom_call.1} parent=1 // pred_region
      %s30 = ssub.s32 4096, 4096
      %31 = vsyncadd [#allocation6], %s30
      %s32 = sshll.u32 [#allocation5], 4
      %s33 = int_to_ptr.vmem [resolvable:$true] %s32
      %38 = dma.hbm_to_vmem [thread:$0]  %s1, 4096, %s33, [#allocation6], 256, 256, 16
    $region9: #{tpu_custom_call.1} parent=1 // pred_fallthru
      _
    // Predicated region
    $region10: #{tpu_custom_call.1} parent=1 // pred_check
      _
    $region11: #{tpu_custom_call.1} parent=1 // pred_check_branch
      %40 = sbr.rel (0) target = $region13
    $region12: #{tpu_custom_call.1} parent=1 // pred_region
      _
    $region13: #{tpu_custom_call.1} parent=1 // pred_fallthru
      _
    // Predicated region
    $region14: #{tpu_custom_call.1} parent=1 // pred_check
      _
    $region15: #{tpu_custom_call.1} parent=1 // pred_check_branch
      %42 = sbr.rel (0) target = $region17
    $region16: #{tpu_custom_call.1} parent=1 // pred_region
      %s44 = ssub.s32 4096, 4096
      %45 = vsyncadd [#allocation6], %s44
      %s46 = sshll.u32 [#allocation7], 4
      %s47 = int_to_ptr.vmem [resolvable:$true] %s46
      %52 = dma.hbm_to_vmem [thread:$0]  %s3, 4096, %s47, [#allocation6], 128, 128, 8
    $region17: #{tpu_custom_call.1} parent=1 // pred_fallthru
      _
    // Predicated region
    $region18: #{tpu_custom_call.1} parent=1 // pred_check
      _
    $region19: #{tpu_custom_call.1} parent=1 // pred_check_branch
      %54 = sbr.rel (0) target = $region21
    $region20: #{tpu_custom_call.1} parent=1 // pred_region
      _
    $region21: #{tpu_custom_call.1} parent=1 // pred_fallthru
      _
    // Predicated region
    $region22: #{tpu_custom_call.1} parent=1 // pred_check
      _
    $region23: #{tpu_custom_call.1} parent=1 // pred_check_branch
      %56 = sbr.rel (0) target = $region25
    $region24: #{tpu_custom_call.1} parent=1 // pred_region
      _
    $region25: #{tpu_custom_call.1} parent=1 // pred_fallthru
      _
    // Predicated region
    $region26: #{tpu_custom_call.1} parent=1 // pred_check
      _
    $region27: #{tpu_custom_call.1} parent=1 // pred_check_branch
      %58 = sbr.rel (0) target = $region29
    $region28: #{tpu_custom_call.1} parent=1 // pred_region
      _
    $region29: #{tpu_custom_call.1} parent=1 // pred_fallthru
      _
    // Predicated region
    $region30: #{tpu_custom_call.1} parent=1 // pred_check
      _
    $region31: #{tpu_custom_call.1} parent=1 // pred_check_branch
      %60 = sbr.rel (0) target = $region33
    $region32: #{tpu_custom_call.1} parent=1 // pred_region
      %61 = dma.done [#allocation3], 256
    $region33: #{tpu_custom_call.1} parent=1 // pred_fallthru
      _
    // Predicated region
    $region34: #{tpu_custom_call.1} parent=1 // pred_check
      _
    $region35: #{tpu_custom_call.1} parent=1 // pred_check_branch
      %63 = sbr.rel (0) target = $region37
    $region36: #{tpu_custom_call.1} parent=1 // pred_region
      %64 = dma.done [#allocation6], 4096
    $region37: #{tpu_custom_call.1} parent=1 // pred_fallthru
      _
    // Predicated region
    $region38: #{tpu_custom_call.1} parent=1 // pred_check
      _
    $region39: #{tpu_custom_call.1} parent=1 // pred_check_branch
      %66 = sbr.rel (0) target = $region41
    $region40: #{tpu_custom_call.1} parent=1 // pred_region
      %67 = dma.done [#allocation6], 4096
    $region41: #{tpu_custom_call.1} parent=1 // pred_fallthru
      _
    %v68 = vld [vmem:[#allocation2] sm:$0xff]
    %v69 = vld [vmem:[#allocation2 + $0x8] sm:$0xff]
    %v70 = vld [vmem:[#allocation5] sm:$0xff]
    %v71 = vld [vmem:[#allocation5 + $0x8] sm:$0xff]
    %v72 = vld [vmem:[#allocation5 + $0x10] sm:$0xff]
    %v73 = vld [vmem:[#allocation5 + $0x18] sm:$0xff]
    %v74 = vld [vmem:[#allocation5 + $0x20] sm:$0xff]
    %v75 = vld [vmem:[#allocation5 + $0x28] sm:$0xff]
    %v76 = vld [vmem:[#allocation5 + $0x30] sm:$0xff]
    %v77 = vld [vmem:[#allocation5 + $0x38] sm:$0xff]
    %v78 = vld [vmem:[#allocation5 + $0x40] sm:$0xff]
    %v79 = vld [vmem:[#allocation5 + $0x48] sm:$0xff]
    %v80 = vld [vmem:[#allocation5 + $0x50] sm:$0xff]
    %v81 = vld [vmem:[#allocation5 + $0x58] sm:$0xff]
    %v82 = vld [vmem:[#allocation5 + $0x60] sm:$0xff]
    %v83 = vld [vmem:[#allocation5 + $0x68] sm:$0xff]
    %v84 = vld [vmem:[#allocation5 + $0x70] sm:$0xff]
    %v85 = vld [vmem:[#allocation5 + $0x78] sm:$0xff]
    %v86 = vld [vmem:[#allocation5 + $0x80] sm:$0xff]
    %v87 = vld [vmem:[#allocation5 + $0x88] sm:$0xff]
    %v88 = vld [vmem:[#allocation5 + $0x90] sm:$0xff]
    %v89 = vld [vmem:[#allocation5 + $0x98] sm:$0xff]
    %v90 = vld [vmem:[#allocation5 + $0xa0] sm:$0xff]
    %v91 = vld [vmem:[#allocation5 + $0xa8] sm:$0xff]
    %v92 = vld [vmem:[#allocation5 + $0xb0] sm:$0xff]
    %v93 = vld [vmem:[#allocation5 + $0xb8] sm:$0xff]
    %v94 = vld [vmem:[#allocation5 + $0xc0] sm:$0xff]
    %v95 = vld [vmem:[#allocation5 + $0xc8] sm:$0xff]
    %v96 = vld [vmem:[#allocation5 + $0xd0] sm:$0xff]
    %v97 = vld [vmem:[#allocation5 + $0xd8] sm:$0xff]
    %v98 = vld [vmem:[#allocation5 + $0xe0] sm:$0xff]
    %v99 = vld [vmem:[#allocation5 + $0xe8] sm:$0xff]
    %v100 = vld [vmem:[#allocation5 + $0xf0] sm:$0xff]
    %v101 = vld [vmem:[#allocation5 + $0xf8] sm:$0xff]
    %v102 = vld [vmem:[%s2] sm:$0x3]
    %v104 = vlaneseq
    %v105 = vshrl.u32 %v104, 7
    %v106 = vsub.s32 0, %v105
    %v107 = vrot.slane %v102, %v106
    %v108 = vlaneseq
    %v109 = vshrl.u32 %v108, 7
    %v110 = vsub.s32 1, %v109
    %v111 = vrot.slane %v102, %v110
    %114 = vmatprep.subr.mxu0 %v71
    %115 = vmatpush1.msra.mxu0 %v70
    %116 = vmatprep.subr.mxu0 %v73
    %117 = vmatpush1.msra.mxu0 %v72
    %118 = vmatprep.subr.mxu0 %v75
    %119 = vmatpush1.msra.mxu0 %v74
    %120 = vmatprep.subr.mxu0 %v77
    %121 = vmatpush1.msra.mxu0 %v76
    %122 = vmatprep.subr.mxu0 %v79
    %123 = vmatpush1.msra.mxu0 %v78
    %124 = vmatprep.subr.mxu0 %v81
    %125 = vmatpush1.msra.mxu0 %v80
    %126 = vmatprep.subr.mxu0 %v83
    %127 = vmatpush1.msra.mxu0 %v82
    %128 = vmatprep.subr.mxu0 %v85
    %129 = vmatpush1.msra.mxu0 %v84
    %130 = vmatprep.subr.mxu0 %v87
    %131 = vmatpush1.msra.mxu0 %v86
    %132 = vmatprep.subr.mxu0 %v89
    %133 = vmatpush1.msra.mxu0 %v88
    %134 = vmatprep.subr.mxu0 %v91
    %135 = vmatpush1.msra.mxu0 %v90
    %136 = vmatprep.subr.mxu0 %v93
    %137 = vmatpush1.msra.mxu0 %v92
    %138 = vmatprep.subr.mxu0 %v95
    %139 = vmatpush1.msra.mxu0 %v94
    %140 = vmatprep.subr.mxu0 %v97
    %141 = vmatpush1.msra.mxu0 %v96
    %142 = vmatprep.subr.mxu0 %v99
    %143 = vmatpush1.msra.mxu0 %v98
    %144 = vmatprep.subr.mxu0 %v101
    %145 = vmatpush1.msra.mxu0 %v100
    %146 = vmatprep.subr.mxu0 0.0
    %147 = vmatpush1.msra.mxu0 0.0
    %148 = vmatprep.subr.mxu0 0.0
    %149 = vmatpush1.msra.mxu0 0.0
    %150 = vmatprep.subr.mxu0 0.0
    %151 = vmatpush1.msra.mxu0 0.0
    %152 = vmatprep.subr.mxu0 0.0
    %153 = vmatpush1.msra.mxu0 0.0
    %154 = vmatprep.subr.mxu0 0.0
    %155 = vmatpush1.msra.mxu0 0.0
    %156 = vmatprep.subr.mxu0 0.0
    %157 = vmatpush1.msra.mxu0 0.0
    %158 = vmatprep.subr.mxu0 0.0
    %159 = vmatpush1.msra.mxu0 0.0
    %160 = vmatprep.subr.mxu0 0.0
    %161 = vmatpush1.msra.mxu0 0.0
    %162 = vmatprep.subr.mxu0 0.0
    %163 = vmatpush1.msra.mxu0 0.0
    %164 = vmatprep.subr.mxu0 0.0
    %165 = vmatpush1.msra.mxu0 0.0
    %166 = vmatprep.subr.mxu0 0.0
    %167 = vmatpush1.msra.mxu0 0.0
    %168 = vmatprep.subr.mxu0 0.0
    %169 = vmatpush1.msra.mxu0 0.0
    %170 = vmatprep.subr.mxu0 0.0
    %171 = vmatpush1.msra.mxu0 0.0
    %172 = vmatprep.subr.mxu0 0.0
    %173 = vmatpush1.msra.mxu0 0.0
    %174 = vmatprep.subr.mxu0 0.0
    %175 = vmatpush1.msra.mxu0 0.0
    %176 = vmatprep.subr.mxu0 0.0
    %177 = vmatpush1.msra.mxu0 0.0
    %178 = vmatprep.mubr.f32.mxu0 0.0
    %179 = vmatmul.mubr.f32.gmra.mrb[0].mxu0 %v68
    %v180 = vpop.f32.mrb[0].mxu0
    %v181 = vadd.f32 %v107, %v180
    %v182 = vpop.f32.mrb[0].mxu0
    %v183 = vadd.f32 %v111, %v182
    %184 = vmatprep.mubr.f32.mxu0 0.0
    %185 = vmatmul.mubr.f32.gmra.mrb[0].mxu0 %v69
    %v186 = vpop.f32.mrb[0].mxu0
    %v187 = vadd.f32 %v107, %v186
    %v188 = vpop.f32.mrb[0].mxu0
    %v189 = vadd.f32 %v111, %v188
    %190 = vdwg.mxu0
    %v191 = vmax.f32 %v181, 0.0
    %v192 = vmax.f32 %v183, 0.0
    %v193 = vmax.f32 %v187, 0.0
    %v194 = vmax.f32 %v189, 0.0
    %v195 = vld [vmem:[#allocation7] sm:$0xff]
    %v196 = vld [vmem:[#allocation7 + $0x8] sm:$0xff]
    %v197 = vld [vmem:[#allocation7 + $0x10] sm:$0xff]
    %v198 = vld [vmem:[#allocation7 + $0x18] sm:$0xff]
    %v199 = vld [vmem:[#allocation7 + $0x20] sm:$0xff]
    %v200 = vld [vmem:[#allocation7 + $0x28] sm:$0xff]
    %v201 = vld [vmem:[#allocation7 + $0x30] sm:$0xff]
    %v202 = vld [vmem:[#allocation7 + $0x38] sm:$0xff]
    %v203 = vld [vmem:[#allocation7 + $0x40] sm:$0xff]
    %v204 = vld [vmem:[#allocation7 + $0x48] sm:$0xff]
    %v205 = vld [vmem:[#allocation7 + $0x50] sm:$0xff]
    %v206 = vld [vmem:[#allocation7 + $0x58] sm:$0xff]
    %v207 = vld [vmem:[#allocation7 + $0x60] sm:$0xff]
    %v208 = vld [vmem:[#allocation7 + $0x68] sm:$0xff]
    %v209 = vld [vmem:[#allocation7 + $0x70] sm:$0xff]
    %v210 = vld [vmem:[#allocation7 + $0x78] sm:$0xff]
    %v211 = vld [vmem:[#allocation7 + $0x80] sm:$0xff]
    %v212 = vld [vmem:[#allocation7 + $0x88] sm:$0xff]
    %v213 = vld [vmem:[#allocation7 + $0x90] sm:$0xff]
    %v214 = vld [vmem:[#allocation7 + $0x98] sm:$0xff]
    %v215 = vld [vmem:[#allocation7 + $0xa0] sm:$0xff]
    %v216 = vld [vmem:[#allocation7 + $0xa8] sm:$0xff]
    %v217 = vld [vmem:[#allocation7 + $0xb0] sm:$0xff]
    %v218 = vld [vmem:[#allocation7 + $0xb8] sm:$0xff]
    %v219 = vld [vmem:[#allocation7 + $0xc0] sm:$0xff]
    %v220 = vld [vmem:[#allocation7 + $0xc8] sm:$0xff]
    %v221 = vld [vmem:[#allocation7 + $0xd0] sm:$0xff]
    %v222 = vld [vmem:[#allocation7 + $0xd8] sm:$0xff]
    %v223 = vld [vmem:[#allocation7 + $0xe0] sm:$0xff]
    %v224 = vld [vmem:[#allocation7 + $0xe8] sm:$0xff]
    %v225 = vld [vmem:[#allocation7 + $0xf0] sm:$0xff]
    %v226 = vld [vmem:[#allocation7 + $0xf8] sm:$0xff]
    %v227 = vld [vmem:[%s4] sm:$0x1]
    %v228 = vld [vmem:[%s5] sm:$0x1]
    %v229 = vld [vmem:[%s6] sm:$0x1]
    %v231 = vlaneseq
    %v232 = vshrl.u32 %v231, 7
    %v233 = vsub.s32 0, %v232
    %v234 = vrot.slane %v227, %v233
    %236 = vmatprep.subr.mxu0 0.0
    %237 = vmatpush1.msra.mxu0 %v195
    %238 = vmatprep.subr.mxu0 0.0
    %239 = vmatpush1.msra.mxu0 %v196
    %240 = vmatprep.subr.mxu0 0.0
    %241 = vmatpush1.msra.mxu0 %v197
    %242 = vmatprep.subr.mxu0 0.0
    %243 = vmatpush1.msra.mxu0 %v198
    %244 = vmatprep.subr.mxu0 0.0
    %245 = vmatpush1.msra.mxu0 %v199
    %246 = vmatprep.subr.mxu0 0.0
    %247 = vmatpush1.msra.mxu0 %v200
    %248 = vmatprep.subr.mxu0 0.0
    %249 = vmatpush1.msra.mxu0 %v201
    %250 = vmatprep.subr.mxu0 0.0
    %251 = vmatpush1.msra.mxu0 %v202
    %252 = vmatprep.subr.mxu0 0.0
    %253 = vmatpush1.msra.mxu0 %v203
    %254 = vmatprep.subr.mxu0 0.0
    %255 = vmatpush1.msra.mxu0 %v204
    %256 = vmatprep.subr.mxu0 0.0
    %257 = vmatpush1.msra.mxu0 %v205
    %258 = vmatprep.subr.mxu0 0.0
    %259 = vmatpush1.msra.mxu0 %v206
    %260 = vmatprep.subr.mxu0 0.0
    %261 = vmatpush1.msra.mxu0 %v207
    %262 = vmatprep.subr.mxu0 0.0
    %263 = vmatpush1.msra.mxu0 %v208
    %264 = vmatprep.subr.mxu0 0.0
    %265 = vmatpush1.msra.mxu0 %v209
    %266 = vmatprep.subr.mxu0 0.0
    %267 = vmatpush1.msra.mxu0 %v210
    %268 = vmatprep.subr.mxu0 0.0
    %269 = vmatpush1.msra.mxu0 %v211
    %270 = vmatprep.subr.mxu0 0.0
    %271 = vmatpush1.msra.mxu0 %v212
    %272 = vmatprep.subr.mxu0 0.0
    %273 = vmatpush1.msra.mxu0 %v213
    %274 = vmatprep.subr.mxu0 0.0
    %275 = vmatpush1.msra.mxu0 %v214
    %276 = vmatprep.subr.mxu0 0.0
    %277 = vmatpush1.msra.mxu0 %v215
    %278 = vmatprep.subr.mxu0 0.0
    %279 = vmatpush1.msra.mxu0 %v216
    %280 = vmatprep.subr.mxu0 0.0
    %281 = vmatpush1.msra.mxu0 %v217
    %282 = vmatprep.subr.mxu0 0.0
    %283 = vmatpush1.msra.mxu0 %v218
    %284 = vmatprep.subr.mxu0 0.0
    %285 = vmatpush1.msra.mxu0 %v219
    %286 = vmatprep.subr.mxu0 0.0
    %287 = vmatpush1.msra.mxu0 %v220
    %288 = vmatprep.subr.mxu0 0.0
    %289 = vmatpush1.msra.mxu0 %v221
    %290 = vmatprep.subr.mxu0 0.0
    %291 = vmatpush1.msra.mxu0 %v222
    %292 = vmatprep.subr.mxu0 0.0
    %293 = vmatpush1.msra.mxu0 %v223
    %294 = vmatprep.subr.mxu0 0.0
    %295 = vmatpush1.msra.mxu0 %v224
    %296 = vmatprep.subr.mxu0 0.0
    %297 = vmatpush1.msra.mxu0 %v225
    %298 = vmatprep.subr.mxu0 0.0
    %299 = vmatpush1.msra.mxu0 %v226
    %300 = vmatprep.mubr.f32.mxu0 %v192
    %301 = vmatmul.mubr.f32.gmra.mrb[0].mxu0 %v191
    %v302 = vpop.f32.mrb[0].mxu0
    %v303 = vadd.f32 %v234, %v302
    %v304 = vpop.f32.mrb[0].mxu0
    %305 = vmatprep.mubr.f32.mxu0 %v194
    %306 = vmatmul.mubr.f32.gmra.mrb[0].mxu0 %v193
    %v307 = vpop.f32.mrb[0].mxu0
    %v308 = vadd.f32 %v234, %v307
    %v309 = vpop.f32.mrb[0].mxu0
    %310 = vdwg.mxu0
    %v311 = vadd.f32 %v303, %v68
    %v312 = vadd.f32 %v308, %v69
    %313 = vadd.xlane.f32.xlu0 %v311
    %v314 = vpop.xlane.xlu0 %313
    %315 = vadd.xlane.f32.xlu0 %v312
    %v316 = vpop.xlane.xlu0 %315
    %v317 = vmul.f32 %v314, 0.0078125
    %v318 = vmul.f32 %v316, 0.0078125
    %v319 = vmul.f32 %v311, %v311
    %v320 = vmul.f32 %v312, %v312
    %321 = vadd.xlane.f32.xlu0 %v319
    %v322 = vpop.xlane.xlu0 %321
    %323 = vadd.xlane.f32.xlu0 %v320
    %v324 = vpop.xlane.xlu0 %323
    %v325 = vmul.f32 %v322, 0.0078125
    %v326 = vmul.f32 %v324, 0.0078125
    %v327 = vmul.f32 %v317, %v317
    %v328 = vmul.f32 %v318, %v318
    %v329 = vsub.f32 %v325, %v327
    %v330 = vsub.f32 %v326, %v328
    %v331 = vmax.f32 %v329, 0.0
    %v332 = vmax.f32 %v330, 0.0
    %v333 = vsub.f32 %v311, %v317
    %v334 = vsub.f32 %v312, %v318
    %v335 = vadd.f32 %v331, 1e-05
    %v336 = vadd.f32 %v332, 1e-05
    %v337 = vrsqrt.pop %v335
    %v338 = vrsqrt.pop %v336
    %v339 = vmul.f32 %v333, %v337
    %v340 = vmul.f32 %v334, %v338
    %v342 = vlaneseq
    %v343 = vshrl.u32 %v342, 7
    %v344 = vsub.s32 0, %v343
    %v345 = vrot.slane %v228, %v344
    %v347 = vmul.f32 %v339, %v345
    %v348 = vmul.f32 %v340, %v345
    %v350 = vlaneseq
    %v351 = vshrl.u32 %v350, 7
    %v352 = vsub.s32 0, %v351
    %v353 = vrot.slane %v229, %v352
    %v355 = vadd.f32 %v347, %v353
    %v356 = vadd.f32 %v348, %v353
    %357 = vst [vmem:[#allocation8] sm:$0xff] %v355
    %358 = vst [vmem:[#allocation8 + $0x8] sm:$0xff] %v356
    // Predicated region
    $region42: #{tpu_custom_call.1} parent=1 // pred_check
      _
    $region43: #{tpu_custom_call.1} parent=1 // pred_check_branch
      %360 = sbr.rel (0) target = $region45
    $region44: #{tpu_custom_call.1} parent=1 // pred_region
      %s362 = ssub.s32 256, 256
      %363 = vsyncadd [#allocation4], %s362
      %s364 = sshll.u32 [#allocation8], 4
      %s365 = int_to_ptr.vmem [resolvable:$true] %s364
      %370 = dma.vmem_to_hbm [thread:$0]  %s365, 256, %s7, [#allocation4], 128, 128, 8
    $region45: #{tpu_custom_call.1} parent=1 // pred_fallthru
      _
    // Predicated region
    $region46: #{tpu_custom_call.1} parent=1 // pred_check
      _
    $region47: #{tpu_custom_call.1} parent=1 // pred_check_branch
      %372 = sbr.rel (0) target = $region49
    $region48: #{tpu_custom_call.1} parent=1 // pred_region
      %373 = dma.done [#allocation4], 256
    $region49: #{tpu_custom_call.1} parent=1 // pred_fallthru
      _
    %374 = vsyncpa [#allocation3], 1
    %375 = vsyncpa [#allocation6], 1
    %376 = vsyncpa [#allocation4], 1

</llo_original>
